<compile_context>
chip_gen: v6e
topology: v6e:2x2x1
jax: 0.10.0
libtpu: 0.0.40
codegen_flags: <defaults>
</compile_context>

<pallas_src>
import functools

import numpy as np
import jax
import jax.numpy as jnp
from jax.experimental import pallas as pl
from jax.experimental.pallas import tpu as pltpu


def adaptive_pool_matrix(in_size: int, out_size: int) -> np.ndarray:
    """(out_size, in_size) averaging matrix reproducing nn.AdaptiveAvgPool semantics."""
    m = np.zeros((out_size, in_size), dtype=np.float32)
    for o in range(out_size):
        start = (o * in_size) // out_size
        end = -((-(o + 1) * in_size) // out_size)  # ceil((o+1)*in/out)
        m[o, start:end] = 1.0 / (end - start)
    return m


def _zerohead_kernel(*refs, n_levels):
    """refs = (x_0..x_{L-1}, K_0..K_{L-1}, bias, out).

    Grid = (batch tiles,).  Per tile:
        out = bias + sum_l  x_l (TN, C_l*H_l*W_l) @ K_l (C_l*H_l*W_l, 2F)
    All heads / tasks / the mean are already folded into K_l and bias.
    """
    x_refs = refs[:n_levels]
    k_refs = refs[n_levels:2 * n_levels]
    b_ref = refs[2 * n_levels]
    out_ref = refs[2 * n_levels + 1]

    acc = jnp.broadcast_to(b_ref[...], out_ref.shape).astype(jnp.float32)
    for x_ref, k_ref in zip(x_refs, k_refs):
        acc = acc + jnp.dot(x_ref[...], k_ref[...],
                            preferred_element_type=jnp.float32)
    out_ref[...] = acc


def zerohead_forward(x_flats, k_mats, bias):
    """x_flats: list of (N, K_l) f32.  k_mats: list of (K_l, 2F) f32.  bias: (1, 2F).

    Returns (N, 2F) f32 = bias + sum_l x_l @ K_l, computed in one pallas_call.
    """
    n = x_flats[0].shape[0]
    f2 = bias.shape[1]
    n_levels = len(x_flats)

    # Batch tile: full batch for small / non-8-multiple N, else 8-aligned tiles.
    tn = n if (n % 8 != 0) else min(n, 128)
    grid = (pl.cdiv(n, tn),)

    in_specs = []
    for x in x_flats:
        kdim = x.shape[1]
        in_specs.append(pl.BlockSpec((tn, kdim), lambda i: (i, 0)))
    for k in k_mats:
        kdim = k.shape[0]
        in_specs.append(pl.BlockSpec((kdim, f2), lambda i: (0, 0)))
    in_specs.append(pl.BlockSpec((1, f2), lambda i: (0, 0)))

    kernel = functools.partial(_zerohead_kernel, n_levels=n_levels)
    return pl.pallas_call(
        kernel,
        out_shape=jax.ShapeDtypeStruct((n, f2), jnp.float32),
        grid_spec=pltpu.PrefetchScalarGridSpec(
            num_scalar_prefetch=0,
            grid=grid,
            in_specs=in_specs,
            out_specs=pl.BlockSpec((tn, f2), lambda i: (i, 0)),
        ),
        compiler_params=pltpu.CompilerParams(
            dimension_semantics=("parallel",)),
    )(*x_flats, *k_mats, bias)


class ZeroHeadPallas:
    """Pallas port of ZeroHead. Parameters are initialized deterministically in-script."""

    def __init__(self, in_channels_list, avg_pool_outputs, num_joints, num_classes, key):
        self.in_channels_list = list(in_channels_list)
        self.avg_pool_outputs = list(avg_pool_outputs)
        self.task_features = [f for f in (num_classes, num_joints) if f != 0]
        # torch.cat(..., dim=-1) in the original forward requires equal head widths.
        assert len(set(self.task_features)) == 1
        self.params = []  # per level: list of (weight (F, C*S), bias (F,)) per task
        for in_ch, s in zip(self.in_channels_list, self.avg_pool_outputs):
            level = []
            for nf in self.task_features:
                key, kw, kb = jax.random.split(key, 3)
                fan_in = s * in_ch
                bound = 1.0 / np.sqrt(fan_in)
                w = jax.random.uniform(kw, (nf, fan_in), jnp.float32, -bound, bound)
                b = jax.random.uniform(kb, (nf,), jnp.float32, -bound, bound)
                level.append((w, b))
            self.params.append(level)

    def __call__(self, xs):
        n = xs[0].shape[0]
        f = self.task_features[0]
        nh = len(self.in_channels_list) * len(self.task_features)  # number of heads

        x_flats, k_mats = [], []
        b_acc = jnp.zeros((f,), jnp.float32)
        for x, in_ch, s, level in zip(xs, self.in_channels_list,
                                      self.avg_pool_outputs, self.params):
            _, c, h, w_dim = x.shape
            assert c == in_ch
            ph = jnp.asarray(adaptive_pool_matrix(h, s))        # (S, H)
            pw = jnp.asarray(adaptive_pool_matrix(w_dim, 2))    # (2, W)
            # Fold pooling + Linear (+ sum over the tasks sharing this level) into one
            # static (C*H*W, 2*F) matrix; column index = p*F + f (lane-dense output).
            k_lvl = jnp.zeros((c * h * w_dim, 2 * f), jnp.float32)
            for (wgt, b) in level:
                w_cfs = wgt.reshape(f, c, s)
                k_t = jnp.einsum('fcs,sh,pw->chwpf', w_cfs, ph, pw)
                k_lvl = k_lvl + k_t.reshape(c * h * w_dim, 2 * f)
                b_acc = b_acc + b
            x_flats.append(x.reshape(n, c * h * w_dim).astype(jnp.float32))
            k_mats.append(k_lvl / nh)   # fold the mean over heads into the weights

        bias = jnp.tile(b_acc / nh, 2).reshape(1, 2 * f)        # [p*F + f] layout
        out_flat = zerohead_forward(x_flats, k_mats, bias)      # (N, 2F)
        # layout plumbing only: (N, 2F) -> (N, 2, F) -> (N, F, 2)
        return out_flat.reshape(n, 2, f).transpose(0, 2, 1)

    def reference(self, xs):
        """Pure-JAX reference mirroring the PyTorch forward, for verification."""
        outs = []
        for x, s, level in zip(xs, self.avg_pool_outputs, self.params):
            n, c, h, w_dim = x.shape
            ph = jnp.asarray(adaptive_pool_matrix(h, s))
            pw = jnp.asarray(adaptive_pool_matrix(w_dim, 2))
            pooled = jnp.einsum('sh,nchw,pw->ncsp', ph, x, pw)      # AdaptiveAvgPool2d((S,2))
            for (wgt, b) in level:
                flat = pooled.reshape(n, c * s, 2).transpose(0, 2, 1)  # Flatten + ChannelLast
                y = flat @ wgt.T + b                                    # Linear
                outs.append(y.transpose(0, 2, 1))                       # ChannelLast
        return jnp.mean(jnp.stack(outs, axis=-1), axis=-1)


if __name__ == "__main__":
    in_channels_list = [4, 8]
    avg_pool_outputs = [4, 2]
    num_joints = 8
    num_classes = 8
    batch = 2

    model = ZeroHeadPallas(in_channels_list, avg_pool_outputs,
                           num_joints, num_classes, jax.random.PRNGKey(0))

    kx0, kx1 = jax.random.split(jax.random.PRNGKey(1))
    xs = [
        jax.random.normal(kx0, (batch, 4, 16, 16), jnp.float32),
        jax.random.normal(kx1, (batch, 8, 8, 8), jnp.float32),
    ]

    out = jax.block_until_ready(model(xs))
    assert out.shape == (batch, num_classes, 2)

    ref = jax.block_until_ready(model.reference(xs))
    np.testing.assert_allclose(np.asarray(out), np.asarray(ref), rtol=1e-4, atol=1e-4)

    print("KERNEL_OK")
</pallas_src>

<mosaic_0001>
module attributes {stable_mosaic.version = 11 : i64} {
  func.func @_zerohead_kernel(%arg0: i32, %arg1: memref<2x1024xf32, #tpu.memory_space<vmem>>, %arg2: memref<2x512xf32, #tpu.memory_space<vmem>>, %arg3: memref<1024x16xf32, #tpu.memory_space<vmem>>, %arg4: memref<512x16xf32, #tpu.memory_space<vmem>>, %arg5: memref<1x16xf32, #tpu.memory_space<vmem>>, %arg6: memref<2x16xf32, #tpu.memory_space<vmem>>) attributes {dimension_semantics = [#tpu.dimension_semantics<parallel>], iteration_bounds = array<i64: 1>, scalar_prefetch = 0 : i64, scratch_operands = 0 : i64, tpu.core_type = #tpu.core_type<tc>, window_params = [{transform_indices = @transform_0, window_bounds = array<i64: 2, 1024>}, {transform_indices = @transform_1, window_bounds = array<i64: 2, 512>}, {pipeline_mode = #tpu.pipeline_mode<synchronous>, transform_indices = @transform_2, window_bounds = array<i64: 1024, 16>}, {pipeline_mode = #tpu.pipeline_mode<synchronous>, transform_indices = @transform_3, window_bounds = array<i64: 512, 16>}, {pipeline_mode = #tpu.pipeline_mode<synchronous>, transform_indices = @transform_4, window_bounds = array<i64: 1, 16>}, {transform_indices = @transform_5, window_bounds = array<i64: 2, 16>}]} {
    %c0 = arith.constant 0 : index
    %c0_0 = arith.constant 0 : index
    %0 = vector.load %arg5[%c0, %c0_0] : memref<1x16xf32, #tpu.memory_space<vmem>>, vector<1x16xf32>
    %1 = vector.shape_cast %0 : vector<1x16xf32> to vector<1x16xf32>
    %2 = vector.broadcast %1 : vector<1x16xf32> to vector<2x16xf32>
    %c0_1 = arith.constant 0 : index
    %c0_2 = arith.constant 0 : index
    %3 = vector.load %arg1[%c0_1, %c0_2] : memref<2x1024xf32, #tpu.memory_space<vmem>>, vector<2x1024xf32>
    %c0_3 = arith.constant 0 : index
    %c0_4 = arith.constant 0 : index
    %4 = vector.load %arg3[%c0_3, %c0_4] : memref<1024x16xf32, #tpu.memory_space<vmem>>, vector<1024x16xf32>
    %cst = arith.constant dense<0.000000e+00> : vector<2x16xf32>
    %5 = tpu.matmul %3, %4, %cst {dimension_numbers = #tpu.dot_dimension_numbers<[1], [0], [0], [1], [0, 0, 1, 1], [], []>} : vector<2x1024xf32>, vector<1024x16xf32>, vector<2x16xf32> -> vector<2x16xf32>
    %6 = arith.addf %2, %5 : vector<2x16xf32>
    %c0_5 = arith.constant 0 : index
    %c0_6 = arith.constant 0 : index
    %7 = vector.load %arg2[%c0_5, %c0_6] : memref<2x512xf32, #tpu.memory_space<vmem>>, vector<2x512xf32>
    %c0_7 = arith.constant 0 : index
    %c0_8 = arith.constant 0 : index
    %8 = vector.load %arg4[%c0_7, %c0_8] : memref<512x16xf32, #tpu.memory_space<vmem>>, vector<512x16xf32>
    %cst_9 = arith.constant dense<0.000000e+00> : vector<2x16xf32>
    %9 = tpu.matmul %7, %8, %cst_9 {dimension_numbers = #tpu.dot_dimension_numbers<[1], [0], [0], [1], [0, 0, 1, 1], [], []>} : vector<2x512xf32>, vector<512x16xf32>, vector<2x16xf32> -> vector<2x16xf32>
    %10 = arith.addf %6, %9 : vector<2x16xf32>
    %c0_10 = arith.constant 0 : index
    %c0_11 = arith.constant 0 : index
    %11 = vector.load %arg6[%c0_10, %c0_11] : memref<2x16xf32, #tpu.memory_space<vmem>>, vector<2x16xf32>
    tpu.vector_store %arg6[%c0_10, %c0_11], %10 {strides = array<i32>} : memref<2x16xf32, #tpu.memory_space<vmem>>, vector<2x16xf32>,
    return
  }
  func.func @transform_0(%arg0: i32) -> (i32, i32) {
    %c0_i32 = arith.constant 0 : i32
    %c0_i32_0 = arith.constant 0 : i32
    return %arg0, %c0_i32 : i32, i32
  }
  func.func @transform_1(%arg0: i32) -> (i32, i32) {
    %c0_i32 = arith.constant 0 : i32
    %c0_i32_0 = arith.constant 0 : i32
    return %arg0, %c0_i32 : i32, i32
  }
  func.func @transform_2(%arg0: i32) -> (i32, i32) {
    %c0_i32 = arith.constant 0 : i32
    %c0_i32_0 = arith.constant 0 : i32
    %c0_i32_1 = arith.constant 0 : i32
    return %c0_i32, %c0_i32_0 : i32, i32
  }
  func.func @transform_3(%arg0: i32) -> (i32, i32) {
    %c0_i32 = arith.constant 0 : i32
    %c0_i32_0 = arith.constant 0 : i32
    %c0_i32_1 = arith.constant 0 : i32
    return %c0_i32, %c0_i32_0 : i32, i32
  }
  func.func @transform_4(%arg0: i32) -> (i32, i32) {
    %c0_i32 = arith.constant 0 : i32
    %c0_i32_0 = arith.constant 0 : i32
    %c0_i32_1 = arith.constant 0 : i32
    return %c0_i32, %c0_i32_0 : i32, i32
  }
  func.func @transform_5(%arg0: i32) -> (i32, i32) {
    %c0_i32 = arith.constant 0 : i32
    %c0_i32_0 = arith.constant 0 : i32
    return %arg0, %c0_i32 : i32, i32
  }
}

</mosaic_0001>

<llo_original>
// kernel: tpu_custom_call.1
$region0: #{tpu_custom_call.1}
  #allocation0 [shape = 'u32[]', space=smem, size = 0x4, offset = 0x4, fixed_abs, tag = 'smem constant byte address 0x4 - core index']
  #allocation1 [shape = 'u32[144,128]{1,0:T(1,128)}', space=vmem, size = 0x12000, scoped, tag = 'internal scratch']
  %s0 = inlined_call_operand.vmem [shape: f32[2,1024], index: 0, kind: input, shape index: {}]
  %s1 = inlined_call_operand.vmem [shape: f32[2,512], index: 1, kind: input, shape index: {}]
  %s2 = inlined_call_operand.vmem [shape: f32[1024,16], index: 2, kind: input, shape index: {}]
  %s3 = inlined_call_operand.vmem [shape: f32[512,16], index: 3, kind: input, shape index: {}]
  %s4 = inlined_call_operand.vmem [shape: f32[1,16], index: 4, kind: input, shape index: {}]
  %s5 = inlined_call_operand.hbm [shape: f32[2,16], index: 5, kind: output, shape index: {}]
  %s6 = sld [smem:[#allocation0]]
  $region30: #{tpu_custom_call.1} parent=0
    _
  %s8 = ssub.s32 1, %s6
  %s9 = scalar_select 0, %s8, %s6
  $region1: #{tpu_custom_call.1} parent=0
    #allocation2 [shape = 'u8[1024]{0}', space=vmem, size = 0x400, scoped, tag = 'output window, operand 0, single buffered']
    #allocation3 [shape = 's32[1]{0}', space=sflag, size = 0x4, scoped, tag = 'scoped memory for tpu_custom_call.1']
    %10 = vsyncpa [#allocation3], 0
    // Predicated region
    $region2: #{tpu_custom_call.1} parent=1 // pred_check
      _
    $region3: #{tpu_custom_call.1} parent=1 // pred_check_branch
      %12 = sbr.rel (0) target = $region5
    $region4: #{tpu_custom_call.1} parent=1 // pred_region
      _
    $region5: #{tpu_custom_call.1} parent=1 // pred_fallthru
      _
    // Predicated region
    $region6: #{tpu_custom_call.1} parent=1 // pred_check
      _
    $region7: #{tpu_custom_call.1} parent=1 // pred_check_branch
      %14 = sbr.rel (0) target = $region9
    $region8: #{tpu_custom_call.1} parent=1 // pred_region
      _
    $region9: #{tpu_custom_call.1} parent=1 // pred_fallthru
      _
    // Predicated region
    $region10: #{tpu_custom_call.1} parent=1 // pred_check
      _
    $region11: #{tpu_custom_call.1} parent=1 // pred_check_branch
      %16 = sbr.rel (0) target = $region13
    $region12: #{tpu_custom_call.1} parent=1 // pred_region
      _
    $region13: #{tpu_custom_call.1} parent=1 // pred_fallthru
      _
    // Predicated region
    $region14: #{tpu_custom_call.1} parent=1 // pred_check
      _
    $region15: #{tpu_custom_call.1} parent=1 // pred_check_branch
      %18 = sbr.rel (0) target = $region17
    $region16: #{tpu_custom_call.1} parent=1 // pred_region
      _
    $region17: #{tpu_custom_call.1} parent=1 // pred_fallthru
      _
    // Predicated region
    $region18: #{tpu_custom_call.1} parent=1 // pred_check
      _
    $region19: #{tpu_custom_call.1} parent=1 // pred_check_branch
      %20 = sbr.rel (0) target = $region21
    $region20: #{tpu_custom_call.1} parent=1 // pred_region
      _
    $region21: #{tpu_custom_call.1} parent=1 // pred_fallthru
      _
    %v21 = vld [vmem:[%s4] sm:$0x1]
    %v23 = vlaneseq
    %v24 = vshrl.u32 %v23, 7
    %v25 = vsub.s32 0, %v24
    %v26 = vrot.slane %v21, %v25
    %v28 = vld [vmem:[%s0] sm:$0xff]
    %v29 = vld [vmem:[%s0 + $0x8] sm:$0xff]
    %v30 = vld [vmem:[%s2] sm:$0xff]
    %v31 = vld [vmem:[%s2 + $0x8] sm:$0xff]
    %v32 = vld [vmem:[%s2 + $0x10] sm:$0xff]
    %v33 = vld [vmem:[%s2 + $0x18] sm:$0xff]
    %v34 = vld [vmem:[%s2 + $0x20] sm:$0xff]
    %v35 = vld [vmem:[%s2 + $0x28] sm:$0xff]
    %v36 = vld [vmem:[%s2 + $0x30] sm:$0xff]
    %v37 = vld [vmem:[%s2 + $0x38] sm:$0xff]
    %v38 = vld [vmem:[%s2 + $0x40] sm:$0xff]
    %v39 = vld [vmem:[%s2 + $0x48] sm:$0xff]
    %v40 = vld [vmem:[%s2 + $0x50] sm:$0xff]
    %v41 = vld [vmem:[%s2 + $0x58] sm:$0xff]
    %v42 = vld [vmem:[%s2 + $0x60] sm:$0xff]
    %v43 = vld [vmem:[%s2 + $0x68] sm:$0xff]
    %v44 = vld [vmem:[%s2 + $0x70] sm:$0xff]
    %v45 = vld [vmem:[%s2 + $0x78] sm:$0xff]
    %v46 = vld [vmem:[%s2 + $0x80] sm:$0xff]
    %v47 = vld [vmem:[%s2 + $0x88] sm:$0xff]
    %v48 = vld [vmem:[%s2 + $0x90] sm:$0xff]
    %v49 = vld [vmem:[%s2 + $0x98] sm:$0xff]
    %v50 = vld [vmem:[%s2 + $0xa0] sm:$0xff]
    %v51 = vld [vmem:[%s2 + $0xa8] sm:$0xff]
    %v52 = vld [vmem:[%s2 + $0xb0] sm:$0xff]
    %v53 = vld [vmem:[%s2 + $0xb8] sm:$0xff]
    %v54 = vld [vmem:[%s2 + $0xc0] sm:$0xff]
    %v55 = vld [vmem:[%s2 + $0xc8] sm:$0xff]
    %v56 = vld [vmem:[%s2 + $0xd0] sm:$0xff]
    %v57 = vld [vmem:[%s2 + $0xd8] sm:$0xff]
    %v58 = vld [vmem:[%s2 + $0xe0] sm:$0xff]
    %v59 = vld [vmem:[%s2 + $0xe8] sm:$0xff]
    %v60 = vld [vmem:[%s2 + $0xf0] sm:$0xff]
    %v61 = vld [vmem:[%s2 + $0xf8] sm:$0xff]
    %v62 = vld [vmem:[%s2 + $0x100] sm:$0xff]
    %v63 = vld [vmem:[%s2 + $0x108] sm:$0xff]
    %v64 = vld [vmem:[%s2 + $0x110] sm:$0xff]
    %v65 = vld [vmem:[%s2 + $0x118] sm:$0xff]
    %v66 = vld [vmem:[%s2 + $0x120] sm:$0xff]
    %v67 = vld [vmem:[%s2 + $0x128] sm:$0xff]
    %v68 = vld [vmem:[%s2 + $0x130] sm:$0xff]
    %v69 = vld [vmem:[%s2 + $0x138] sm:$0xff]
    %v70 = vld [vmem:[%s2 + $0x140] sm:$0xff]
    %v71 = vld [vmem:[%s2 + $0x148] sm:$0xff]
    %v72 = vld [vmem:[%s2 + $0x150] sm:$0xff]
    %v73 = vld [vmem:[%s2 + $0x158] sm:$0xff]
    %v74 = vld [vmem:[%s2 + $0x160] sm:$0xff]
    %v75 = vld [vmem:[%s2 + $0x168] sm:$0xff]
    %v76 = vld [vmem:[%s2 + $0x170] sm:$0xff]
    %v77 = vld [vmem:[%s2 + $0x178] sm:$0xff]
    %v78 = vld [vmem:[%s2 + $0x180] sm:$0xff]
    %v79 = vld [vmem:[%s2 + $0x188] sm:$0xff]
    %v80 = vld [vmem:[%s2 + $0x190] sm:$0xff]
    %v81 = vld [vmem:[%s2 + $0x198] sm:$0xff]
    %v82 = vld [vmem:[%s2 + $0x1a0] sm:$0xff]
    %v83 = vld [vmem:[%s2 + $0x1a8] sm:$0xff]
    %v84 = vld [vmem:[%s2 + $0x1b0] sm:$0xff]
    %v85 = vld [vmem:[%s2 + $0x1b8] sm:$0xff]
    %v86 = vld [vmem:[%s2 + $0x1c0] sm:$0xff]
    %v87 = vld [vmem:[%s2 + $0x1c8] sm:$0xff]
    %v88 = vld [vmem:[%s2 + $0x1d0] sm:$0xff]
    %v89 = vld [vmem:[%s2 + $0x1d8] sm:$0xff]
    %v90 = vld [vmem:[%s2 + $0x1e0] sm:$0xff]
    %v91 = vld [vmem:[%s2 + $0x1e8] sm:$0xff]
    %v92 = vld [vmem:[%s2 + $0x1f0] sm:$0xff]
    %v93 = vld [vmem:[%s2 + $0x1f8] sm:$0xff]
    %v94 = vld [vmem:[%s2 + $0x200] sm:$0xff]
    %v95 = vld [vmem:[%s2 + $0x208] sm:$0xff]
    %v96 = vld [vmem:[%s2 + $0x210] sm:$0xff]
    %v97 = vld [vmem:[%s2 + $0x218] sm:$0xff]
    %v98 = vld [vmem:[%s2 + $0x220] sm:$0xff]
    %v99 = vld [vmem:[%s2 + $0x228] sm:$0xff]
    %v100 = vld [vmem:[%s2 + $0x230] sm:$0xff]
    %v101 = vld [vmem:[%s2 + $0x238] sm:$0xff]
    %v102 = vld [vmem:[%s2 + $0x240] sm:$0xff]
    %v103 = vld [vmem:[%s2 + $0x248] sm:$0xff]
    %v104 = vld [vmem:[%s2 + $0x250] sm:$0xff]
    %v105 = vld [vmem:[%s2 + $0x258] sm:$0xff]
    %v106 = vld [vmem:[%s2 + $0x260] sm:$0xff]
    %v107 = vld [vmem:[%s2 + $0x268] sm:$0xff]
    %v108 = vld [vmem:[%s2 + $0x270] sm:$0xff]
    %v109 = vld [vmem:[%s2 + $0x278] sm:$0xff]
    %v110 = vld [vmem:[%s2 + $0x280] sm:$0xff]
    %v111 = vld [vmem:[%s2 + $0x288] sm:$0xff]
    %v112 = vld [vmem:[%s2 + $0x290] sm:$0xff]
    %v113 = vld [vmem:[%s2 + $0x298] sm:$0xff]
    %v114 = vld [vmem:[%s2 + $0x2a0] sm:$0xff]
    %v115 = vld [vmem:[%s2 + $0x2a8] sm:$0xff]
    %v116 = vld [vmem:[%s2 + $0x2b0] sm:$0xff]
    %v117 = vld [vmem:[%s2 + $0x2b8] sm:$0xff]
    %v118 = vld [vmem:[%s2 + $0x2c0] sm:$0xff]
    %v119 = vld [vmem:[%s2 + $0x2c8] sm:$0xff]
    %v120 = vld [vmem:[%s2 + $0x2d0] sm:$0xff]
    %v121 = vld [vmem:[%s2 + $0x2d8] sm:$0xff]
    %v122 = vld [vmem:[%s2 + $0x2e0] sm:$0xff]
    %v123 = vld [vmem:[%s2 + $0x2e8] sm:$0xff]
    %v124 = vld [vmem:[%s2 + $0x2f0] sm:$0xff]
    %v125 = vld [vmem:[%s2 + $0x2f8] sm:$0xff]
    %v126 = vld [vmem:[%s2 + $0x300] sm:$0xff]
    %v127 = vld [vmem:[%s2 + $0x308] sm:$0xff]
    %v128 = vld [vmem:[%s2 + $0x310] sm:$0xff]
    %v129 = vld [vmem:[%s2 + $0x318] sm:$0xff]
    %v130 = vld [vmem:[%s2 + $0x320] sm:$0xff]
    %v131 = vld [vmem:[%s2 + $0x328] sm:$0xff]
    %v132 = vld [vmem:[%s2 + $0x330] sm:$0xff]
    %v133 = vld [vmem:[%s2 + $0x338] sm:$0xff]
    %v134 = vld [vmem:[%s2 + $0x340] sm:$0xff]
    %v135 = vld [vmem:[%s2 + $0x348] sm:$0xff]
    %v136 = vld [vmem:[%s2 + $0x350] sm:$0xff]
    %v137 = vld [vmem:[%s2 + $0x358] sm:$0xff]
    %v138 = vld [vmem:[%s2 + $0x360] sm:$0xff]
    %v139 = vld [vmem:[%s2 + $0x368] sm:$0xff]
    %v140 = vld [vmem:[%s2 + $0x370] sm:$0xff]
    %v141 = vld [vmem:[%s2 + $0x378] sm:$0xff]
    %v142 = vld [vmem:[%s2 + $0x380] sm:$0xff]
    %v143 = vld [vmem:[%s2 + $0x388] sm:$0xff]
    %v144 = vld [vmem:[%s2 + $0x390] sm:$0xff]
    %v145 = vld [vmem:[%s2 + $0x398] sm:$0xff]
    %v146 = vld [vmem:[%s2 + $0x3a0] sm:$0xff]
    %v147 = vld [vmem:[%s2 + $0x3a8] sm:$0xff]
    %v148 = vld [vmem:[%s2 + $0x3b0] sm:$0xff]
    %v149 = vld [vmem:[%s2 + $0x3b8] sm:$0xff]
    %v150 = vld [vmem:[%s2 + $0x3c0] sm:$0xff]
    %v151 = vld [vmem:[%s2 + $0x3c8] sm:$0xff]
    %v152 = vld [vmem:[%s2 + $0x3d0] sm:$0xff]
    %v153 = vld [vmem:[%s2 + $0x3d8] sm:$0xff]
    %v154 = vld [vmem:[%s2 + $0x3e0] sm:$0xff]
    %v155 = vld [vmem:[%s2 + $0x3e8] sm:$0xff]
    %v156 = vld [vmem:[%s2 + $0x3f0] sm:$0xff]
    %v157 = vld [vmem:[%s2 + $0x3f8] sm:$0xff]
    %v160 = vcombine.high %v28, %v28
    %v162 = vunpack.c.l.s4 1983009808
    %v163 = vunpack.c.0.s8 %v162
    %v164 = vlaneseq
    %v165 = vshrl.u32 %v164, 7
    %v166 = vsub.s32 %v163, %v165
    %v167 = vrot.slane %v28, %v166
    %v169 = vunpack.c.l.s4 1983009808
    %v170 = vunpack.c.0.s8 %v169
    %v171 = vlaneseq
    %v172 = vshrl.u32 %v171, 7
    %v173 = vsub.s32 %v170, %v172
    %v174 = vrot.slane %v160, %v173
    %v175 = vcombine.high %v167, %v167
    %v176 = vcombine.high %v174, %v174
    %v177 = vcombine.high %v29, %v29
    %v179 = vunpack.c.l.s4 1983009808
    %v180 = vunpack.c.0.s8 %v179
    %v181 = vlaneseq
    %v182 = vshrl.u32 %v181, 7
    %v183 = vsub.s32 %v180, %v182
    %v184 = vrot.slane %v29, %v183
    %v186 = vunpack.c.l.s4 1983009808
    %v187 = vunpack.c.0.s8 %v186
    %v188 = vlaneseq
    %v189 = vshrl.u32 %v188, 7
    %v190 = vsub.s32 %v187, %v189
    %v191 = vrot.slane %v177, %v190
    %v192 = vcombine.high %v184, %v184
    %v193 = vcombine.high %v191, %v191
    %202 = vmatprep.subr.mxu0 0.0
    %203 = vmatpush1.msra.mxu0 %v45
    %204 = vmatprep.subr.mxu0 0.0
    %205 = vmatpush1.msra.mxu0 %v44
    %206 = vmatprep.subr.mxu0 0.0
    %207 = vmatpush1.msra.mxu0 %v43
    %208 = vmatprep.subr.mxu0 0.0
    %209 = vmatpush1.msra.mxu0 %v42
    %210 = vmatprep.subr.mxu0 0.0
    %211 = vmatpush1.msra.mxu0 %v41
    %212 = vmatprep.subr.mxu0 0.0
    %213 = vmatpush1.msra.mxu0 %v40
    %214 = vmatprep.subr.mxu0 0.0
    %215 = vmatpush1.msra.mxu0 %v39
    %216 = vmatprep.subr.mxu0 0.0
    %217 = vmatpush1.msra.mxu0 %v38
    %218 = vmatprep.subr.mxu0 0.0
    %219 = vmatpush1.msra.mxu0 %v37
    %220 = vmatprep.subr.mxu0 0.0
    %221 = vmatpush1.msra.mxu0 %v36
    %222 = vmatprep.subr.mxu0 0.0
    %223 = vmatpush1.msra.mxu0 %v35
    %224 = vmatprep.subr.mxu0 0.0
    %225 = vmatpush1.msra.mxu0 %v34
    %226 = vmatprep.subr.mxu0 0.0
    %227 = vmatpush1.msra.mxu0 %v33
    %228 = vmatprep.subr.mxu0 0.0
    %229 = vmatpush1.msra.mxu0 %v32
    %230 = vmatprep.subr.mxu0 0.0
    %231 = vmatpush1.msra.mxu0 %v31
    %232 = vmatprep.subr.mxu0 0.0
    %233 = vmatpush1.msra.mxu0 %v30
    %234 = vmatprep.subr.mxu0 0.0
    %235 = vmatpush2.msra.mxu0 %v61
    %236 = vmatprep.subr.mxu0 0.0
    %237 = vmatpush2.msra.mxu0 %v60
    %238 = vmatprep.subr.mxu0 0.0
    %239 = vmatpush2.msra.mxu0 %v59
    %240 = vmatprep.subr.mxu0 0.0
    %241 = vmatpush2.msra.mxu0 %v58
    %242 = vmatprep.subr.mxu0 0.0
    %243 = vmatpush2.msra.mxu0 %v57
    %244 = vmatprep.subr.mxu0 0.0
    %245 = vmatpush2.msra.mxu0 %v56
    %246 = vmatprep.subr.mxu0 0.0
    %247 = vmatpush2.msra.mxu0 %v55
    %248 = vmatprep.subr.mxu0 0.0
    %249 = vmatpush2.msra.mxu0 %v54
    %250 = vmatprep.subr.mxu0 0.0
    %251 = vmatpush2.msra.mxu0 %v53
    %252 = vmatprep.subr.mxu0 0.0
    %253 = vmatpush2.msra.mxu0 %v52
    %254 = vmatprep.subr.mxu0 0.0
    %255 = vmatpush2.msra.mxu0 %v51
    %256 = vmatprep.subr.mxu0 0.0
    %257 = vmatpush2.msra.mxu0 %v50
    %258 = vmatprep.subr.mxu0 0.0
    %259 = vmatpush2.msra.mxu0 %v49
    %260 = vmatprep.subr.mxu0 0.0
    %261 = vmatpush2.msra.mxu0 %v48
    %262 = vmatprep.subr.mxu0 0.0
    %263 = vmatpush2.msra.mxu0 %v47
    %264 = vmatprep.subr.mxu0 0.0
    %265 = vmatpush2.msra.mxu0 %v46
    %266 = vmatprep.mubr.f32.mxu0 %v175
    %267 = vmatmul.mubr.f32.gmra.mxu0 %v167
    %v268 = vpop.f32.mrf.mxu0
    %v269 = vadd.f32 0.0, %v268
    %v270 = vpop.f32.mrf.mxu0
    %271 = vdwg.mxu0
    %272 = vmatprep.subr.mxu0 0.0
    %273 = vmatpush1.msra.mxu0 %v77
    %274 = vmatprep.subr.mxu0 0.0
    %275 = vmatpush1.msra.mxu0 %v76
    %276 = vmatprep.subr.mxu0 0.0
    %277 = vmatpush1.msra.mxu0 %v75
    %278 = vmatprep.subr.mxu0 0.0
    %279 = vmatpush1.msra.mxu0 %v74
    %280 = vmatprep.subr.mxu0 0.0
    %281 = vmatpush1.msra.mxu0 %v73
    %282 = vmatprep.subr.mxu0 0.0
    %283 = vmatpush1.msra.mxu0 %v72
    %284 = vmatprep.subr.mxu0 0.0
    %285 = vmatpush1.msra.mxu0 %v71
    %286 = vmatprep.subr.mxu0 0.0
    %287 = vmatpush1.msra.mxu0 %v70
    %288 = vmatprep.subr.mxu0 0.0
    %289 = vmatpush1.msra.mxu0 %v69
    %290 = vmatprep.subr.mxu0 0.0
    %291 = vmatpush1.msra.mxu0 %v68
    %292 = vmatprep.subr.mxu0 0.0
    %293 = vmatpush1.msra.mxu0 %v67
    %294 = vmatprep.subr.mxu0 0.0
    %295 = vmatpush1.msra.mxu0 %v66
    %296 = vmatprep.subr.mxu0 0.0
    %297 = vmatpush1.msra.mxu0 %v65
    %298 = vmatprep.subr.mxu0 0.0
    %299 = vmatpush1.msra.mxu0 %v64
    %300 = vmatprep.subr.mxu0 0.0
    %301 = vmatpush1.msra.mxu0 %v63
    %302 = vmatprep.subr.mxu0 0.0
    %303 = vmatpush1.msra.mxu0 %v62
    %304 = vmatprep.subr.mxu0 0.0
    %305 = vmatpush2.msra.mxu0 %v93
    %306 = vmatprep.subr.mxu0 0.0
    %307 = vmatpush2.msra.mxu0 %v92
    %308 = vmatprep.subr.mxu0 0.0
    %309 = vmatpush2.msra.mxu0 %v91
    %310 = vmatprep.subr.mxu0 0.0
    %311 = vmatpush2.msra.mxu0 %v90
    %312 = vmatprep.subr.mxu0 0.0
    %313 = vmatpush2.msra.mxu0 %v89
    %314 = vmatprep.subr.mxu0 0.0
    %315 = vmatpush2.msra.mxu0 %v88
    %316 = vmatprep.subr.mxu0 0.0
    %317 = vmatpush2.msra.mxu0 %v87
    %318 = vmatprep.subr.mxu0 0.0
    %319 = vmatpush2.msra.mxu0 %v86
    %320 = vmatprep.subr.mxu0 0.0
    %321 = vmatpush2.msra.mxu0 %v85
    %322 = vmatprep.subr.mxu0 0.0
    %323 = vmatpush2.msra.mxu0 %v84
    %324 = vmatprep.subr.mxu0 0.0
    %325 = vmatpush2.msra.mxu0 %v83
    %326 = vmatprep.subr.mxu0 0.0
    %327 = vmatpush2.msra.mxu0 %v82
    %328 = vmatprep.subr.mxu0 0.0
    %329 = vmatpush2.msra.mxu0 %v81
    %330 = vmatprep.subr.mxu0 0.0
    %331 = vmatpush2.msra.mxu0 %v80
    %332 = vmatprep.subr.mxu0 0.0
    %333 = vmatpush2.msra.mxu0 %v79
    %334 = vmatprep.subr.mxu0 0.0
    %335 = vmatpush2.msra.mxu0 %v78
    %336 = vmatprep.mubr.f32.mxu0 %v176
    %337 = vmatmul.mubr.f32.gmra.mxu0 %v174
    %v338 = vpop.f32.mrf.mxu0
    %v339 = vadd.f32 %v269, %v338
    %v340 = vpop.f32.mrf.mxu0
    %341 = vdwg.mxu0
    %342 = vmatprep.subr.mxu0 0.0
    %343 = vmatpush1.msra.mxu0 %v109
    %344 = vmatprep.subr.mxu0 0.0
    %345 = vmatpush1.msra.mxu0 %v108
    %346 = vmatprep.subr.mxu0 0.0
    %347 = vmatpush1.msra.mxu0 %v107
    %348 = vmatprep.subr.mxu0 0.0
    %349 = vmatpush1.msra.mxu0 %v106
    %350 = vmatprep.subr.mxu0 0.0
    %351 = vmatpush1.msra.mxu0 %v105
    %352 = vmatprep.subr.mxu0 0.0
    %353 = vmatpush1.msra.mxu0 %v104
    %354 = vmatprep.subr.mxu0 0.0
    %355 = vmatpush1.msra.mxu0 %v103
    %356 = vmatprep.subr.mxu0 0.0
    %357 = vmatpush1.msra.mxu0 %v102
    %358 = vmatprep.subr.mxu0 0.0
    %359 = vmatpush1.msra.mxu0 %v101
    %360 = vmatprep.subr.mxu0 0.0
    %361 = vmatpush1.msra.mxu0 %v100
    %362 = vmatprep.subr.mxu0 0.0
    %363 = vmatpush1.msra.mxu0 %v99
    %364 = vmatprep.subr.mxu0 0.0
    %365 = vmatpush1.msra.mxu0 %v98
    %366 = vmatprep.subr.mxu0 0.0
    %367 = vmatpush1.msra.mxu0 %v97
    %368 = vmatprep.subr.mxu0 0.0
    %369 = vmatpush1.msra.mxu0 %v96
    %370 = vmatprep.subr.mxu0 0.0
    %371 = vmatpush1.msra.mxu0 %v95
    %372 = vmatprep.subr.mxu0 0.0
    %373 = vmatpush1.msra.mxu0 %v94
    %374 = vmatprep.subr.mxu0 0.0
    %375 = vmatpush2.msra.mxu0 %v125
    %376 = vmatprep.subr.mxu0 0.0
    %377 = vmatpush2.msra.mxu0 %v124
    %378 = vmatprep.subr.mxu0 0.0
    %379 = vmatpush2.msra.mxu0 %v123
    %380 = vmatprep.subr.mxu0 0.0
    %381 = vmatpush2.msra.mxu0 %v122
    %382 = vmatprep.subr.mxu0 0.0
    %383 = vmatpush2.msra.mxu0 %v121
    %384 = vmatprep.subr.mxu0 0.0
    %385 = vmatpush2.msra.mxu0 %v120
    %386 = vmatprep.subr.mxu0 0.0
    %387 = vmatpush2.msra.mxu0 %v119
    %388 = vmatprep.subr.mxu0 0.0
    %389 = vmatpush2.msra.mxu0 %v118
    %390 = vmatprep.subr.mxu0 0.0
    %391 = vmatpush2.msra.mxu0 %v117
    %392 = vmatprep.subr.mxu0 0.0
    %393 = vmatpush2.msra.mxu0 %v116
    %394 = vmatprep.subr.mxu0 0.0
    %395 = vmatpush2.msra.mxu0 %v115
    %396 = vmatprep.subr.mxu0 0.0
    %397 = vmatpush2.msra.mxu0 %v114
    %398 = vmatprep.subr.mxu0 0.0
    %399 = vmatpush2.msra.mxu0 %v113
    %400 = vmatprep.subr.mxu0 0.0
    %401 = vmatpush2.msra.mxu0 %v112
    %402 = vmatprep.subr.mxu0 0.0
    %403 = vmatpush2.msra.mxu0 %v111
    %404 = vmatprep.subr.mxu0 0.0
    %405 = vmatpush2.msra.mxu0 %v110
    %406 = vmatprep.mubr.f32.mxu0 %v192
    %407 = vmatmul.mubr.f32.gmra.mxu0 %v184
    %v408 = vpop.f32.mrf.mxu0
    %v409 = vadd.f32 %v339, %v408
    %v410 = vpop.f32.mrf.mxu0
    %411 = vdwg.mxu0
    %412 = vmatprep.subr.mxu0 0.0
    %413 = vmatpush1.msra.mxu0 %v141
    %414 = vmatprep.subr.mxu0 0.0
    %415 = vmatpush1.msra.mxu0 %v140
    %416 = vmatprep.subr.mxu0 0.0
    %417 = vmatpush1.msra.mxu0 %v139
    %418 = vmatprep.subr.mxu0 0.0
    %419 = vmatpush1.msra.mxu0 %v138
    %420 = vmatprep.subr.mxu0 0.0
    %421 = vmatpush1.msra.mxu0 %v137
    %422 = vmatprep.subr.mxu0 0.0
    %423 = vmatpush1.msra.mxu0 %v136
    %424 = vmatprep.subr.mxu0 0.0
    %425 = vmatpush1.msra.mxu0 %v135
    %426 = vmatprep.subr.mxu0 0.0
    %427 = vmatpush1.msra.mxu0 %v134
    %428 = vmatprep.subr.mxu0 0.0
    %429 = vmatpush1.msra.mxu0 %v133
    %430 = vmatprep.subr.mxu0 0.0
    %431 = vmatpush1.msra.mxu0 %v132
    %432 = vmatprep.subr.mxu0 0.0
    %433 = vmatpush1.msra.mxu0 %v131
    %434 = vmatprep.subr.mxu0 0.0
    %435 = vmatpush1.msra.mxu0 %v130
    %436 = vmatprep.subr.mxu0 0.0
    %437 = vmatpush1.msra.mxu0 %v129
    %438 = vmatprep.subr.mxu0 0.0
    %439 = vmatpush1.msra.mxu0 %v128
    %440 = vmatprep.subr.mxu0 0.0
    %441 = vmatpush1.msra.mxu0 %v127
    %442 = vmatprep.subr.mxu0 0.0
    %443 = vmatpush1.msra.mxu0 %v126
    %444 = vmatprep.subr.mxu0 0.0
    %445 = vmatpush2.msra.mxu0 %v157
    %446 = vmatprep.subr.mxu0 0.0
    %447 = vmatpush2.msra.mxu0 %v156
    %448 = vmatprep.subr.mxu0 0.0
    %449 = vmatpush2.msra.mxu0 %v155
    %450 = vmatprep.subr.mxu0 0.0
    %451 = vmatpush2.msra.mxu0 %v154
    %452 = vmatprep.subr.mxu0 0.0
    %453 = vmatpush2.msra.mxu0 %v153
    %454 = vmatprep.subr.mxu0 0.0
    %455 = vmatpush2.msra.mxu0 %v152
    %456 = vmatprep.subr.mxu0 0.0
    %457 = vmatpush2.msra.mxu0 %v151
    %458 = vmatprep.subr.mxu0 0.0
    %459 = vmatpush2.msra.mxu0 %v150
    %460 = vmatprep.subr.mxu0 0.0
    %461 = vmatpush2.msra.mxu0 %v149
    %462 = vmatprep.subr.mxu0 0.0
    %463 = vmatpush2.msra.mxu0 %v148
    %464 = vmatprep.subr.mxu0 0.0
    %465 = vmatpush2.msra.mxu0 %v147
    %466 = vmatprep.subr.mxu0 0.0
    %467 = vmatpush2.msra.mxu0 %v146
    %468 = vmatprep.subr.mxu0 0.0
    %469 = vmatpush2.msra.mxu0 %v145
    %470 = vmatprep.subr.mxu0 0.0
    %471 = vmatpush2.msra.mxu0 %v144
    %472 = vmatprep.subr.mxu0 0.0
    %473 = vmatpush2.msra.mxu0 %v143
    %474 = vmatprep.subr.mxu0 0.0
    %475 = vmatpush2.msra.mxu0 %v142
    %476 = vmatprep.mubr.f32.mxu0 %v193
    %477 = vmatmul.mubr.f32.gmra.mxu0 %v191
    %v478 = vpop.f32.mrf.mxu0
    %v479 = vadd.f32 %v409, %v478
    %v480 = vpop.f32.mrf.mxu0
    %481 = vdwg.mxu0
    %v482 = vadd.f32 %v26, %v479
    %v483 = vld [vmem:[%s1] sm:$0xff]
    %v484 = vld [vmem:[%s3] sm:$0xff]
    %v485 = vld [vmem:[%s3 + $0x8] sm:$0xff]
    %v486 = vld [vmem:[%s3 + $0x10] sm:$0xff]
    %v487 = vld [vmem:[%s3 + $0x18] sm:$0xff]
    %v488 = vld [vmem:[%s3 + $0x20] sm:$0xff]
    %v489 = vld [vmem:[%s3 + $0x28] sm:$0xff]
    %v490 = vld [vmem:[%s3 + $0x30] sm:$0xff]
    %v491 = vld [vmem:[%s3 + $0x38] sm:$0xff]
    %v492 = vld [vmem:[%s3 + $0x40] sm:$0xff]
    %v493 = vld [vmem:[%s3 + $0x48] sm:$0xff]
    %v494 = vld [vmem:[%s3 + $0x50] sm:$0xff]
    %v495 = vld [vmem:[%s3 + $0x58] sm:$0xff]
    %v496 = vld [vmem:[%s3 + $0x60] sm:$0xff]
    %v497 = vld [vmem:[%s3 + $0x68] sm:$0xff]
    %v498 = vld [vmem:[%s3 + $0x70] sm:$0xff]
    %v499 = vld [vmem:[%s3 + $0x78] sm:$0xff]
    %v500 = vld [vmem:[%s3 + $0x80] sm:$0xff]
    %v501 = vld [vmem:[%s3 + $0x88] sm:$0xff]
    %v502 = vld [vmem:[%s3 + $0x90] sm:$0xff]
    %v503 = vld [vmem:[%s3 + $0x98] sm:$0xff]
    %v504 = vld [vmem:[%s3 + $0xa0] sm:$0xff]
    %v505 = vld [vmem:[%s3 + $0xa8] sm:$0xff]
    %v506 = vld [vmem:[%s3 + $0xb0] sm:$0xff]
    %v507 = vld [vmem:[%s3 + $0xb8] sm:$0xff]
    %v508 = vld [vmem:[%s3 + $0xc0] sm:$0xff]
    %v509 = vld [vmem:[%s3 + $0xc8] sm:$0xff]
    %v510 = vld [vmem:[%s3 + $0xd0] sm:$0xff]
    %v511 = vld [vmem:[%s3 + $0xd8] sm:$0xff]
    %v512 = vld [vmem:[%s3 + $0xe0] sm:$0xff]
    %v513 = vld [vmem:[%s3 + $0xe8] sm:$0xff]
    %v514 = vld [vmem:[%s3 + $0xf0] sm:$0xff]
    %v515 = vld [vmem:[%s3 + $0xf8] sm:$0xff]
    %v516 = vld [vmem:[%s3 + $0x100] sm:$0xff]
    %v517 = vld [vmem:[%s3 + $0x108] sm:$0xff]
    %v518 = vld [vmem:[%s3 + $0x110] sm:$0xff]
    %v519 = vld [vmem:[%s3 + $0x118] sm:$0xff]
    %v520 = vld [vmem:[%s3 + $0x120] sm:$0xff]
    %v521 = vld [vmem:[%s3 + $0x128] sm:$0xff]
    %v522 = vld [vmem:[%s3 + $0x130] sm:$0xff]
    %v523 = vld [vmem:[%s3 + $0x138] sm:$0xff]
    %v524 = vld [vmem:[%s3 + $0x140] sm:$0xff]
    %v525 = vld [vmem:[%s3 + $0x148] sm:$0xff]
    %v526 = vld [vmem:[%s3 + $0x150] sm:$0xff]
    %v527 = vld [vmem:[%s3 + $0x158] sm:$0xff]
    %v528 = vld [vmem:[%s3 + $0x160] sm:$0xff]
    %v529 = vld [vmem:[%s3 + $0x168] sm:$0xff]
    %v530 = vld [vmem:[%s3 + $0x170] sm:$0xff]
    %v531 = vld [vmem:[%s3 + $0x178] sm:$0xff]
    %v532 = vld [vmem:[%s3 + $0x180] sm:$0xff]
    %v533 = vld [vmem:[%s3 + $0x188] sm:$0xff]
    %v534 = vld [vmem:[%s3 + $0x190] sm:$0xff]
    %v535 = vld [vmem:[%s3 + $0x198] sm:$0xff]
    %v536 = vld [vmem:[%s3 + $0x1a0] sm:$0xff]
    %v537 = vld [vmem:[%s3 + $0x1a8] sm:$0xff]
    %v538 = vld [vmem:[%s3 + $0x1b0] sm:$0xff]
    %v539 = vld [vmem:[%s3 + $0x1b8] sm:$0xff]
    %v540 = vld [vmem:[%s3 + $0x1c0] sm:$0xff]
    %v541 = vld [vmem:[%s3 + $0x1c8] sm:$0xff]
    %v542 = vld [vmem:[%s3 + $0x1d0] sm:$0xff]
    %v543 = vld [vmem:[%s3 + $0x1d8] sm:$0xff]
    %v544 = vld [vmem:[%s3 + $0x1e0] sm:$0xff]
    %v545 = vld [vmem:[%s3 + $0x1e8] sm:$0xff]
    %v546 = vld [vmem:[%s3 + $0x1f0] sm:$0xff]
    %v547 = vld [vmem:[%s3 + $0x1f8] sm:$0xff]
    %v549 = vcombine.high %v483, %v483
    %v551 = vunpack.c.l.s4 1983009808
    %v552 = vunpack.c.0.s8 %v551
    %v553 = vlaneseq
    %v554 = vshrl.u32 %v553, 7
    %v555 = vsub.s32 %v552, %v554
    %v556 = vrot.slane %v483, %v555
    %v558 = vunpack.c.l.s4 1983009808
    %v559 = vunpack.c.0.s8 %v558
    %v560 = vlaneseq
    %v561 = vshrl.u32 %v560, 7
    %v562 = vsub.s32 %v559, %v561
    %v563 = vrot.slane %v549, %v562
    %v564 = vcombine.high %v556, %v556
    %v565 = vcombine.high %v563, %v563
    %570 = vmatprep.subr.mxu0 0.0
    %571 = vmatpush1.msra.mxu0 %v499
    %572 = vmatprep.subr.mxu0 0.0
    %573 = vmatpush1.msra.mxu0 %v498
    %574 = vmatprep.subr.mxu0 0.0
    %575 = vmatpush1.msra.mxu0 %v497
    %576 = vmatprep.subr.mxu0 0.0
    %577 = vmatpush1.msra.mxu0 %v496
    %578 = vmatprep.subr.mxu0 0.0
    %579 = vmatpush1.msra.mxu0 %v495
    %580 = vmatprep.subr.mxu0 0.0
    %581 = vmatpush1.msra.mxu0 %v494
    %582 = vmatprep.subr.mxu0 0.0
    %583 = vmatpush1.msra.mxu0 %v493
    %584 = vmatprep.subr.mxu0 0.0
    %585 = vmatpush1.msra.mxu0 %v492
    %586 = vmatprep.subr.mxu0 0.0
    %587 = vmatpush1.msra.mxu0 %v491
    %588 = vmatprep.subr.mxu0 0.0
    %589 = vmatpush1.msra.mxu0 %v490
    %590 = vmatprep.subr.mxu0 0.0
    %591 = vmatpush1.msra.mxu0 %v489
    %592 = vmatprep.subr.mxu0 0.0
    %593 = vmatpush1.msra.mxu0 %v488
    %594 = vmatprep.subr.mxu0 0.0
    %595 = vmatpush1.msra.mxu0 %v487
    %596 = vmatprep.subr.mxu0 0.0
    %597 = vmatpush1.msra.mxu0 %v486
    %598 = vmatprep.subr.mxu0 0.0
    %599 = vmatpush1.msra.mxu0 %v485
    %600 = vmatprep.subr.mxu0 0.0
    %601 = vmatpush1.msra.mxu0 %v484
    %602 = vmatprep.subr.mxu0 0.0
    %603 = vmatpush2.msra.mxu0 %v515
    %604 = vmatprep.subr.mxu0 0.0
    %605 = vmatpush2.msra.mxu0 %v514
    %606 = vmatprep.subr.mxu0 0.0
    %607 = vmatpush2.msra.mxu0 %v513
    %608 = vmatprep.subr.mxu0 0.0
    %609 = vmatpush2.msra.mxu0 %v512
    %610 = vmatprep.subr.mxu0 0.0
    %611 = vmatpush2.msra.mxu0 %v511
    %612 = vmatprep.subr.mxu0 0.0
    %613 = vmatpush2.msra.mxu0 %v510
    %614 = vmatprep.subr.mxu0 0.0
    %615 = vmatpush2.msra.mxu0 %v509
    %616 = vmatprep.subr.mxu0 0.0
    %617 = vmatpush2.msra.mxu0 %v508
    %618 = vmatprep.subr.mxu0 0.0
    %619 = vmatpush2.msra.mxu0 %v507
    %620 = vmatprep.subr.mxu0 0.0
    %621 = vmatpush2.msra.mxu0 %v506
    %622 = vmatprep.subr.mxu0 0.0
    %623 = vmatpush2.msra.mxu0 %v505
    %624 = vmatprep.subr.mxu0 0.0
    %625 = vmatpush2.msra.mxu0 %v504
    %626 = vmatprep.subr.mxu0 0.0
    %627 = vmatpush2.msra.mxu0 %v503
    %628 = vmatprep.subr.mxu0 0.0
    %629 = vmatpush2.msra.mxu0 %v502
    %630 = vmatprep.subr.mxu0 0.0
    %631 = vmatpush2.msra.mxu0 %v501
    %632 = vmatprep.subr.mxu0 0.0
    %633 = vmatpush2.msra.mxu0 %v500
    %634 = vmatprep.mubr.f32.mxu0 %v564
    %635 = vmatmul.mubr.f32.gmra.mxu0 %v556
    %v636 = vpop.f32.mrf.mxu0
    %v637 = vadd.f32 0.0, %v636
    %v638 = vpop.f32.mrf.mxu0
    %639 = vdwg.mxu0
    %640 = vmatprep.subr.mxu0 0.0
    %641 = vmatpush1.msra.mxu0 %v531
    %642 = vmatprep.subr.mxu0 0.0
    %643 = vmatpush1.msra.mxu0 %v530
    %644 = vmatprep.subr.mxu0 0.0
    %645 = vmatpush1.msra.mxu0 %v529
    %646 = vmatprep.subr.mxu0 0.0
    %647 = vmatpush1.msra.mxu0 %v528
    %648 = vmatprep.subr.mxu0 0.0
    %649 = vmatpush1.msra.mxu0 %v527
    %650 = vmatprep.subr.mxu0 0.0
    %651 = vmatpush1.msra.mxu0 %v526
    %652 = vmatprep.subr.mxu0 0.0
    %653 = vmatpush1.msra.mxu0 %v525
    %654 = vmatprep.subr.mxu0 0.0
    %655 = vmatpush1.msra.mxu0 %v524
    %656 = vmatprep.subr.mxu0 0.0
    %657 = vmatpush1.msra.mxu0 %v523
    %658 = vmatprep.subr.mxu0 0.0
    %659 = vmatpush1.msra.mxu0 %v522
    %660 = vmatprep.subr.mxu0 0.0
    %661 = vmatpush1.msra.mxu0 %v521
    %662 = vmatprep.subr.mxu0 0.0
    %663 = vmatpush1.msra.mxu0 %v520
    %664 = vmatprep.subr.mxu0 0.0
    %665 = vmatpush1.msra.mxu0 %v519
    %666 = vmatprep.subr.mxu0 0.0
    %667 = vmatpush1.msra.mxu0 %v518
    %668 = vmatprep.subr.mxu0 0.0
    %669 = vmatpush1.msra.mxu0 %v517
    %670 = vmatprep.subr.mxu0 0.0
    %671 = vmatpush1.msra.mxu0 %v516
    %672 = vmatprep.subr.mxu0 0.0
    %673 = vmatpush2.msra.mxu0 %v547
    %674 = vmatprep.subr.mxu0 0.0
    %675 = vmatpush2.msra.mxu0 %v546
    %676 = vmatprep.subr.mxu0 0.0
    %677 = vmatpush2.msra.mxu0 %v545
    %678 = vmatprep.subr.mxu0 0.0
    %679 = vmatpush2.msra.mxu0 %v544
    %680 = vmatprep.subr.mxu0 0.0
    %681 = vmatpush2.msra.mxu0 %v543
    %682 = vmatprep.subr.mxu0 0.0
    %683 = vmatpush2.msra.mxu0 %v542
    %684 = vmatprep.subr.mxu0 0.0
    %685 = vmatpush2.msra.mxu0 %v541
    %686 = vmatprep.subr.mxu0 0.0
    %687 = vmatpush2.msra.mxu0 %v540
    %688 = vmatprep.subr.mxu0 0.0
    %689 = vmatpush2.msra.mxu0 %v539
    %690 = vmatprep.subr.mxu0 0.0
    %691 = vmatpush2.msra.mxu0 %v538
    %692 = vmatprep.subr.mxu0 0.0
    %693 = vmatpush2.msra.mxu0 %v537
    %694 = vmatprep.subr.mxu0 0.0
    %695 = vmatpush2.msra.mxu0 %v536
    %696 = vmatprep.subr.mxu0 0.0
    %697 = vmatpush2.msra.mxu0 %v535
    %698 = vmatprep.subr.mxu0 0.0
    %699 = vmatpush2.msra.mxu0 %v534
    %700 = vmatprep.subr.mxu0 0.0
    %701 = vmatpush2.msra.mxu0 %v533
    %702 = vmatprep.subr.mxu0 0.0
    %703 = vmatpush2.msra.mxu0 %v532
    %704 = vmatprep.mubr.f32.mxu0 %v565
    %705 = vmatmul.mubr.f32.gmra.mxu0 %v563
    %v706 = vpop.f32.mrf.mxu0
    %v707 = vadd.f32 %v637, %v706
    %v708 = vpop.f32.mrf.mxu0
    %709 = vdwg.mxu0
    %v710 = vadd.f32 %v482, %v707
    %vm711 = vcmask 123904
    %712 = vst.msk [vmem:[#allocation2] sm:$0x3] %vm711, %v710
    // Predicated region
    $region22: #{tpu_custom_call.1} parent=1 // pred_check
      _
    $region23: #{tpu_custom_call.1} parent=1 // pred_check_branch
      %714 = sbr.rel (0) target = $region25
    $region24: #{tpu_custom_call.1} parent=1 // pred_region
      %s716 = ssub.s32 32, 32
      %717 = vsyncadd [#allocation3], %s716
      %s719 = sshll.u32 [#allocation2], 4
      %s720 = int_to_ptr.vmem [resolvable:$true] %s719
      %722 = dma.vmem_to_hbm [thread:$0]  %s720, 32, %s5, [#allocation3]
    $region25: #{tpu_custom_call.1} parent=1 // pred_fallthru
      _
    // Predicated region
    $region26: #{tpu_custom_call.1} parent=1 // pred_check
      _
    $region27: #{tpu_custom_call.1} parent=1 // pred_check_branch
      %724 = sbr.rel (0) target = $region29
    $region28: #{tpu_custom_call.1} parent=1 // pred_region
      %725 = dma.done [#allocation3], 32
    $region29: #{tpu_custom_call.1} parent=1 // pred_fallthru
      _
    %726 = vsyncpa [#allocation3], 1

</llo_original>
